<compile_context>
chip_gen: v7x
topology: tpu7x:2x2x1
jax: 0.10.0
libtpu: 0.0.40
codegen_flags: <defaults>
</compile_context>

<pallas_src>
import functools

import jax
import jax.numpy as jnp
from jax.experimental import pallas as pl
from jax.experimental.pallas import tpu as pltpu


# ----------------------------- Pallas kernel --------------------------------
def _many_to_one_kernel(*refs, num_layers, act):
    """Fused multi-layer RNN (wavefront schedule); writes last-step hidden.

    Ref layout (positional):
      refs[0]                   x_ref     (B, T, input_size)   batch-major
      refs[1 + 2*l + 0]         wcat_ref  (H + D_in_l, H)      [W_hh^T ; W_ih^T]
      refs[1 + 2*l + 1]         b_ref     (1, H)               b_ih + b_hh
      refs[1 + 2*num_layers]    o_ref     (B, H)               output
    """
    x_ref = refs[0]
    layer_refs = refs[1:1 + 2 * num_layers]
    o_ref = refs[1 + 2 * num_layers]

    B, T, _ = x_ref.shape
    H = o_ref.shape[1]

    def activate(v):
        return jnp.tanh(v) if act == "tanh" else jnp.maximum(v, 0.0)

    # Load the (tiny) weights/biases once; they stay VMEM/vreg resident.
    wcat = [layer_refs[2 * l][...] for l in range(num_layers)]      # (H+D_in, H)
    bias = [layer_refs[2 * l + 1][...] for l in range(num_layers)]  # (1, H)

    # One carried hidden per layer (torch: h0 = zeros).
    h = [jnp.zeros((B, H), jnp.float32) for _ in range(num_layers)]

    # Wavefront: at step s, layer l processes timestep t = s - l.  All cells
    # within a step read only the previous step's hiddens (snapshot `h`), so
    # they are independent and can overlap on the MXU.
    for s in range(T + num_layers - 1):                 # static unroll (small)
        h_new = list(h)
        for l in range(num_layers):
            t = s - l
            if t < 0 or t >= T:
                continue
            if l == 0:
                inp = x_ref[:, t, :].astype(jnp.float32)            # (B, I)
            else:
                inp = h[l - 1]                                      # (B, H)
            # Fused cell: [h_prev, inp] @ [W_hh^T ; W_ih^T] + (b_ih + b_hh)
            cell_in = jnp.concatenate([h[l], inp], axis=-1)         # (B, H+D_in)
            h_new[l] = activate(
                jnp.dot(cell_in, wcat[l], preferred_element_type=jnp.float32)
                + bias[l])
        h = h_new

    o_ref[...] = h[num_layers - 1].astype(o_ref.dtype)   # top layer, last step


# ------------------------------ Module wrapper -------------------------------
def prepare_weights(weights):
    """One-time prep: stack [W_hh^T ; W_ih^T] -> (H + D_in, H), sum biases."""
    prepped = []
    for (w_ih, w_hh, b_ih, b_hh) in weights:
        H = w_hh.shape[0]
        w_cat = jnp.concatenate(
            [jnp.asarray(w_hh, jnp.float32).T,      # (H, H)     recurrent first
             jnp.asarray(w_ih, jnp.float32).T],     # (D_in, H)
            axis=0)                                  # (H + D_in, H)
        b = (jnp.asarray(b_ih, jnp.float32)
             + jnp.asarray(b_hh, jnp.float32)).reshape(1, H)
        prepped.append((w_cat, b))
    return prepped


def many_to_one_forward(x, prepped_weights, *, act):
    """x: (B, T, input_size). Returns (B, H): last timestep of top RNN layer."""
    B, T, _ = x.shape
    num_layers = len(prepped_weights)
    H = prepped_weights[0][0].shape[1]

    args = [x]                                       # batch-major, no transpose
    for (wcat, b) in prepped_weights:
        args += [wcat, b]

    vmem = pl.BlockSpec(memory_space=pltpu.MemorySpace.VMEM)
    kernel = functools.partial(_many_to_one_kernel,
                               num_layers=num_layers, act=act)
    return pl.pallas_call(
        kernel,
        out_shape=jax.ShapeDtypeStruct((B, H), jnp.float32),
        in_specs=[vmem] * len(args),
        out_specs=vmem,
    )(*args)


# ------------------------------- Reference -----------------------------------
def many_to_one_ref(x, weights, *, act):
    actf = jnp.tanh if act == "tanh" else (lambda v: jnp.maximum(v, 0.0))
    B, T, _ = x.shape
    inp = x
    for (w_ih, w_hh, b_ih, b_hh) in weights:
        H = w_hh.shape[0]
        h = jnp.zeros((B, H), jnp.float32)
        outs = []
        for t in range(T):
            h = actf(inp[:, t] @ w_ih.T + b_ih + h @ w_hh.T + b_hh)
            outs.append(h)
        inp = jnp.stack(outs, axis=1)
    return inp[:, -1, :]


# --------------------------------- Main --------------------------------------
if __name__ == "__main__":
    params = dict(
        input_size=16,
        hidden_size=32,
        seq_length=8,
        bias=True,
        act_type="tanh",
        num_rec_layers=2,
    )
    B = 2
    I, H, T, L = (params["input_size"], params["hidden_size"],
                  params["seq_length"], params["num_rec_layers"])

    key = jax.random.PRNGKey(0)
    key, xk = jax.random.split(key)
    x = jax.random.normal(xk, (B, T, I), dtype=jnp.float32)

    # Deterministic init, following torch.nn.RNN's U(-1/sqrt(H), 1/sqrt(H)).
    bound = 1.0 / jnp.sqrt(jnp.float32(H))
    weights = []
    for layer in range(L):
        d_in = I if layer == 0 else H
        key, k1, k2, k3, k4 = jax.random.split(key, 5)
        w_ih = jax.random.uniform(k1, (H, d_in), jnp.float32, -bound, bound)
        w_hh = jax.random.uniform(k2, (H, H), jnp.float32, -bound, bound)
        if params["bias"]:
            b_ih = jax.random.uniform(k3, (H,), jnp.float32, -bound, bound)
            b_hh = jax.random.uniform(k4, (H,), jnp.float32, -bound, bound)
        else:
            b_ih = jnp.zeros((H,), jnp.float32)
            b_hh = jnp.zeros((H,), jnp.float32)
        weights.append((w_ih, w_hh, b_ih, b_hh))

    prepped = prepare_weights(weights)                  # one-time prep
    fwd = jax.jit(functools.partial(many_to_one_forward,
                                    act=params["act_type"]))
    out = fwd(x, prepped)
    out = jax.block_until_ready(out)
    assert out.shape == (B, H), out.shape

    ref = many_to_one_ref(x, weights, act=params["act_type"])
    assert jnp.allclose(out, ref, atol=1e-5, rtol=1e-5), "mismatch vs reference"

    print("KERNEL_OK")
</pallas_src>

<mosaic_0001>
module attributes {stable_mosaic.version = 11 : i64} {
  func.func @_many_to_one_kernel(%arg0: memref<2x8x16xf32, #tpu.memory_space<vmem>>, %arg1: memref<48x32xf32, #tpu.memory_space<vmem>>, %arg2: memref<1x32xf32, #tpu.memory_space<vmem>>, %arg3: memref<64x32xf32, #tpu.memory_space<vmem>>, %arg4: memref<1x32xf32, #tpu.memory_space<vmem>>, %arg5: memref<2x32xf32, #tpu.memory_space<vmem>>) attributes {dimension_semantics = [], scalar_prefetch = 0 : i64, scratch_operands = 0 : i64, tpu.core_type = #tpu.core_type<tc>} {
    %c0 = arith.constant 0 : index
    %c0_0 = arith.constant 0 : index
    %0 = vector.load %arg1[%c0, %c0_0] : memref<48x32xf32, #tpu.memory_space<vmem>>, vector<48x32xf32>
    %c0_1 = arith.constant 0 : index
    %c0_2 = arith.constant 0 : index
    %1 = vector.load %arg3[%c0_1, %c0_2] : memref<64x32xf32, #tpu.memory_space<vmem>>, vector<64x32xf32>
    %c0_3 = arith.constant 0 : index
    %c0_4 = arith.constant 0 : index
    %2 = vector.load %arg2[%c0_3, %c0_4] : memref<1x32xf32, #tpu.memory_space<vmem>>, vector<1x32xf32>
    %c0_5 = arith.constant 0 : index
    %c0_6 = arith.constant 0 : index
    %3 = vector.load %arg4[%c0_5, %c0_6] : memref<1x32xf32, #tpu.memory_space<vmem>>, vector<1x32xf32>
    %cst = arith.constant 0.000000e+00 : f32
    %4 = vector.broadcast %cst : f32 to vector<2x32xf32>
    %cst_7 = arith.constant 0.000000e+00 : f32
    %5 = vector.broadcast %cst_7 : f32 to vector<2x32xf32>
    %c0_8 = arith.constant 0 : index
    %c0_9 = arith.constant 0 : index
    %c0_10 = arith.constant 0 : index
    %6 = vector.load %arg0[%c0_8, %c0_9, %c0_10] : memref<2x8x16xf32, #tpu.memory_space<vmem>>, vector<2x1x16xf32>
    %7 = vector.shape_cast %6 : vector<2x1x16xf32> to vector<2x16xf32>
    %8 = tpu.concatenate %4, %7 in 1 : vector<2x32xf32>, vector<2x16xf32> -> vector<2x48xf32>
    %cst_11 = arith.constant dense<0.000000e+00> : vector<2x32xf32>
    %9 = tpu.matmul %8, %0, %cst_11 {dimension_numbers = #tpu.dot_dimension_numbers<[1], [0], [0], [1], [0, 0, 1, 1], [], []>} : vector<2x48xf32>, vector<48x32xf32>, vector<2x32xf32> -> vector<2x32xf32>
    %10 = vector.broadcast %2 : vector<1x32xf32> to vector<2x32xf32>
    %11 = arith.addf %9, %10 : vector<2x32xf32>
    %12 = math.tanh %11 : vector<2x32xf32>
    %c0_12 = arith.constant 0 : index
    %c1 = arith.constant 1 : index
    %c0_13 = arith.constant 0 : index
    %13 = vector.load %arg0[%c0_12, %c1, %c0_13] : memref<2x8x16xf32, #tpu.memory_space<vmem>>, vector<2x1x16xf32>
    %14 = vector.shape_cast %13 : vector<2x1x16xf32> to vector<2x16xf32>
    %15 = tpu.concatenate %12, %14 in 1 : vector<2x32xf32>, vector<2x16xf32> -> vector<2x48xf32>
    %cst_14 = arith.constant dense<0.000000e+00> : vector<2x32xf32>
    %16 = tpu.matmul %15, %0, %cst_14 {dimension_numbers = #tpu.dot_dimension_numbers<[1], [0], [0], [1], [0, 0, 1, 1], [], []>} : vector<2x48xf32>, vector<48x32xf32>, vector<2x32xf32> -> vector<2x32xf32>
    %17 = vector.broadcast %2 : vector<1x32xf32> to vector<2x32xf32>
    %18 = arith.addf %16, %17 : vector<2x32xf32>
    %19 = math.tanh %18 : vector<2x32xf32>
    %20 = tpu.concatenate %5, %12 in 1 : vector<2x32xf32>, vector<2x32xf32> -> vector<2x64xf32>
    %cst_15 = arith.constant dense<0.000000e+00> : vector<2x32xf32>
    %21 = tpu.matmul %20, %1, %cst_15 {dimension_numbers = #tpu.dot_dimension_numbers<[1], [0], [0], [1], [0, 0, 1, 1], [], []>} : vector<2x64xf32>, vector<64x32xf32>, vector<2x32xf32> -> vector<2x32xf32>
    %22 = vector.broadcast %3 : vector<1x32xf32> to vector<2x32xf32>
    %23 = arith.addf %21, %22 : vector<2x32xf32>
    %24 = math.tanh %23 : vector<2x32xf32>
    %c0_16 = arith.constant 0 : index
    %c2 = arith.constant 2 : index
    %c0_17 = arith.constant 0 : index
    %25 = vector.load %arg0[%c0_16, %c2, %c0_17] : memref<2x8x16xf32, #tpu.memory_space<vmem>>, vector<2x1x16xf32>
    %26 = vector.shape_cast %25 : vector<2x1x16xf32> to vector<2x16xf32>
    %27 = tpu.concatenate %19, %26 in 1 : vector<2x32xf32>, vector<2x16xf32> -> vector<2x48xf32>
    %cst_18 = arith.constant dense<0.000000e+00> : vector<2x32xf32>
    %28 = tpu.matmul %27, %0, %cst_18 {dimension_numbers = #tpu.dot_dimension_numbers<[1], [0], [0], [1], [0, 0, 1, 1], [], []>} : vector<2x48xf32>, vector<48x32xf32>, vector<2x32xf32> -> vector<2x32xf32>
    %29 = vector.broadcast %2 : vector<1x32xf32> to vector<2x32xf32>
    %30 = arith.addf %28, %29 : vector<2x32xf32>
    %31 = math.tanh %30 : vector<2x32xf32>
    %32 = tpu.concatenate %24, %19 in 1 : vector<2x32xf32>, vector<2x32xf32> -> vector<2x64xf32>
    %cst_19 = arith.constant dense<0.000000e+00> : vector<2x32xf32>
    %33 = tpu.matmul %32, %1, %cst_19 {dimension_numbers = #tpu.dot_dimension_numbers<[1], [0], [0], [1], [0, 0, 1, 1], [], []>} : vector<2x64xf32>, vector<64x32xf32>, vector<2x32xf32> -> vector<2x32xf32>
    %34 = vector.broadcast %3 : vector<1x32xf32> to vector<2x32xf32>
    %35 = arith.addf %33, %34 : vector<2x32xf32>
    %36 = math.tanh %35 : vector<2x32xf32>
    %c0_20 = arith.constant 0 : index
    %c3 = arith.constant 3 : index
    %c0_21 = arith.constant 0 : index
    %37 = vector.load %arg0[%c0_20, %c3, %c0_21] : memref<2x8x16xf32, #tpu.memory_space<vmem>>, vector<2x1x16xf32>
    %38 = vector.shape_cast %37 : vector<2x1x16xf32> to vector<2x16xf32>
    %39 = tpu.concatenate %31, %38 in 1 : vector<2x32xf32>, vector<2x16xf32> -> vector<2x48xf32>
    %cst_22 = arith.constant dense<0.000000e+00> : vector<2x32xf32>
    %40 = tpu.matmul %39, %0, %cst_22 {dimension_numbers = #tpu.dot_dimension_numbers<[1], [0], [0], [1], [0, 0, 1, 1], [], []>} : vector<2x48xf32>, vector<48x32xf32>, vector<2x32xf32> -> vector<2x32xf32>
    %41 = vector.broadcast %2 : vector<1x32xf32> to vector<2x32xf32>
    %42 = arith.addf %40, %41 : vector<2x32xf32>
    %43 = math.tanh %42 : vector<2x32xf32>
    %44 = tpu.concatenate %36, %31 in 1 : vector<2x32xf32>, vector<2x32xf32> -> vector<2x64xf32>
    %cst_23 = arith.constant dense<0.000000e+00> : vector<2x32xf32>
    %45 = tpu.matmul %44, %1, %cst_23 {dimension_numbers = #tpu.dot_dimension_numbers<[1], [0], [0], [1], [0, 0, 1, 1], [], []>} : vector<2x64xf32>, vector<64x32xf32>, vector<2x32xf32> -> vector<2x32xf32>
    %46 = vector.broadcast %3 : vector<1x32xf32> to vector<2x32xf32>
    %47 = arith.addf %45, %46 : vector<2x32xf32>
    %48 = math.tanh %47 : vector<2x32xf32>
    %c0_24 = arith.constant 0 : index
    %c4 = arith.constant 4 : index
    %c0_25 = arith.constant 0 : index
    %49 = vector.load %arg0[%c0_24, %c4, %c0_25] : memref<2x8x16xf32, #tpu.memory_space<vmem>>, vector<2x1x16xf32>
    %50 = vector.shape_cast %49 : vector<2x1x16xf32> to vector<2x16xf32>
    %51 = tpu.concatenate %43, %50 in 1 : vector<2x32xf32>, vector<2x16xf32> -> vector<2x48xf32>
    %cst_26 = arith.constant dense<0.000000e+00> : vector<2x32xf32>
    %52 = tpu.matmul %51, %0, %cst_26 {dimension_numbers = #tpu.dot_dimension_numbers<[1], [0], [0], [1], [0, 0, 1, 1], [], []>} : vector<2x48xf32>, vector<48x32xf32>, vector<2x32xf32> -> vector<2x32xf32>
    %53 = vector.broadcast %2 : vector<1x32xf32> to vector<2x32xf32>
    %54 = arith.addf %52, %53 : vector<2x32xf32>
    %55 = math.tanh %54 : vector<2x32xf32>
    %56 = tpu.concatenate %48, %43 in 1 : vector<2x32xf32>, vector<2x32xf32> -> vector<2x64xf32>
    %cst_27 = arith.constant dense<0.000000e+00> : vector<2x32xf32>
    %57 = tpu.matmul %56, %1, %cst_27 {dimension_numbers = #tpu.dot_dimension_numbers<[1], [0], [0], [1], [0, 0, 1, 1], [], []>} : vector<2x64xf32>, vector<64x32xf32>, vector<2x32xf32> -> vector<2x32xf32>
    %58 = vector.broadcast %3 : vector<1x32xf32> to vector<2x32xf32>
    %59 = arith.addf %57, %58 : vector<2x32xf32>
    %60 = math.tanh %59 : vector<2x32xf32>
    %c0_28 = arith.constant 0 : index
    %c5 = arith.constant 5 : index
    %c0_29 = arith.constant 0 : index
    %61 = vector.load %arg0[%c0_28, %c5, %c0_29] : memref<2x8x16xf32, #tpu.memory_space<vmem>>, vector<2x1x16xf32>
    %62 = vector.shape_cast %61 : vector<2x1x16xf32> to vector<2x16xf32>
    %63 = tpu.concatenate %55, %62 in 1 : vector<2x32xf32>, vector<2x16xf32> -> vector<2x48xf32>
    %cst_30 = arith.constant dense<0.000000e+00> : vector<2x32xf32>
    %64 = tpu.matmul %63, %0, %cst_30 {dimension_numbers = #tpu.dot_dimension_numbers<[1], [0], [0], [1], [0, 0, 1, 1], [], []>} : vector<2x48xf32>, vector<48x32xf32>, vector<2x32xf32> -> vector<2x32xf32>
    %65 = vector.broadcast %2 : vector<1x32xf32> to vector<2x32xf32>
    %66 = arith.addf %64, %65 : vector<2x32xf32>
    %67 = math.tanh %66 : vector<2x32xf32>
    %68 = tpu.concatenate %60, %55 in 1 : vector<2x32xf32>, vector<2x32xf32> -> vector<2x64xf32>
    %cst_31 = arith.constant dense<0.000000e+00> : vector<2x32xf32>
    %69 = tpu.matmul %68, %1, %cst_31 {dimension_numbers = #tpu.dot_dimension_numbers<[1], [0], [0], [1], [0, 0, 1, 1], [], []>} : vector<2x64xf32>, vector<64x32xf32>, vector<2x32xf32> -> vector<2x32xf32>
    %70 = vector.broadcast %3 : vector<1x32xf32> to vector<2x32xf32>
    %71 = arith.addf %69, %70 : vector<2x32xf32>
    %72 = math.tanh %71 : vector<2x32xf32>
    %c0_32 = arith.constant 0 : index
    %c6 = arith.constant 6 : index
    %c0_33 = arith.constant 0 : index
    %73 = vector.load %arg0[%c0_32, %c6, %c0_33] : memref<2x8x16xf32, #tpu.memory_space<vmem>>, vector<2x1x16xf32>
    %74 = vector.shape_cast %73 : vector<2x1x16xf32> to vector<2x16xf32>
    %75 = tpu.concatenate %67, %74 in 1 : vector<2x32xf32>, vector<2x16xf32> -> vector<2x48xf32>
    %cst_34 = arith.constant dense<0.000000e+00> : vector<2x32xf32>
    %76 = tpu.matmul %75, %0, %cst_34 {dimension_numbers = #tpu.dot_dimension_numbers<[1], [0], [0], [1], [0, 0, 1, 1], [], []>} : vector<2x48xf32>, vector<48x32xf32>, vector<2x32xf32> -> vector<2x32xf32>
    %77 = vector.broadcast %2 : vector<1x32xf32> to vector<2x32xf32>
    %78 = arith.addf %76, %77 : vector<2x32xf32>
    %79 = math.tanh %78 : vector<2x32xf32>
    %80 = tpu.concatenate %72, %67 in 1 : vector<2x32xf32>, vector<2x32xf32> -> vector<2x64xf32>
    %cst_35 = arith.constant dense<0.000000e+00> : vector<2x32xf32>
    %81 = tpu.matmul %80, %1, %cst_35 {dimension_numbers = #tpu.dot_dimension_numbers<[1], [0], [0], [1], [0, 0, 1, 1], [], []>} : vector<2x64xf32>, vector<64x32xf32>, vector<2x32xf32> -> vector<2x32xf32>
    %82 = vector.broadcast %3 : vector<1x32xf32> to vector<2x32xf32>
    %83 = arith.addf %81, %82 : vector<2x32xf32>
    %84 = math.tanh %83 : vector<2x32xf32>
    %c0_36 = arith.constant 0 : index
    %c7 = arith.constant 7 : index
    %c0_37 = arith.constant 0 : index
    %85 = vector.load %arg0[%c0_36, %c7, %c0_37] : memref<2x8x16xf32, #tpu.memory_space<vmem>>, vector<2x1x16xf32>
    %86 = vector.shape_cast %85 : vector<2x1x16xf32> to vector<2x16xf32>
    %87 = tpu.concatenate %79, %86 in 1 : vector<2x32xf32>, vector<2x16xf32> -> vector<2x48xf32>
    %cst_38 = arith.constant dense<0.000000e+00> : vector<2x32xf32>
    %88 = tpu.matmul %87, %0, %cst_38 {dimension_numbers = #tpu.dot_dimension_numbers<[1], [0], [0], [1], [0, 0, 1, 1], [], []>} : vector<2x48xf32>, vector<48x32xf32>, vector<2x32xf32> -> vector<2x32xf32>
    %89 = vector.broadcast %2 : vector<1x32xf32> to vector<2x32xf32>
    %90 = arith.addf %88, %89 : vector<2x32xf32>
    %91 = math.tanh %90 : vector<2x32xf32>
    %92 = tpu.concatenate %84, %79 in 1 : vector<2x32xf32>, vector<2x32xf32> -> vector<2x64xf32>
    %cst_39 = arith.constant dense<0.000000e+00> : vector<2x32xf32>
    %93 = tpu.matmul %92, %1, %cst_39 {dimension_numbers = #tpu.dot_dimension_numbers<[1], [0], [0], [1], [0, 0, 1, 1], [], []>} : vector<2x64xf32>, vector<64x32xf32>, vector<2x32xf32> -> vector<2x32xf32>
    %94 = vector.broadcast %3 : vector<1x32xf32> to vector<2x32xf32>
    %95 = arith.addf %93, %94 : vector<2x32xf32>
    %96 = math.tanh %95 : vector<2x32xf32>
    %97 = tpu.concatenate %96, %91 in 1 : vector<2x32xf32>, vector<2x32xf32> -> vector<2x64xf32>
    %cst_40 = arith.constant dense<0.000000e+00> : vector<2x32xf32>
    %98 = tpu.matmul %97, %1, %cst_40 {dimension_numbers = #tpu.dot_dimension_numbers<[1], [0], [0], [1], [0, 0, 1, 1], [], []>} : vector<2x64xf32>, vector<64x32xf32>, vector<2x32xf32> -> vector<2x32xf32>
    %99 = vector.broadcast %3 : vector<1x32xf32> to vector<2x32xf32>
    %100 = arith.addf %98, %99 : vector<2x32xf32>
    %101 = math.tanh %100 : vector<2x32xf32>
    %c0_41 = arith.constant 0 : index
    %c0_42 = arith.constant 0 : index
    %102 = vector.load %arg5[%c0_41, %c0_42] : memref<2x32xf32, #tpu.memory_space<vmem>>, vector<2x32xf32>
    tpu.vector_store %arg5[%c0_41, %c0_42], %101 {strides = array<i32>} : memref<2x32xf32, #tpu.memory_space<vmem>>, vector<2x32xf32>,
    return
  }
}

</mosaic_0001>

<llo_original>
// kernel: many_to_one_forward.1
$region0: #{many_to_one_forward.1}
  #allocation0 [shape = 'u32[]', space=smem, size = 0x4, offset = 0x4, fixed_abs, tag = 'smem constant byte address 0x4 - core index']
  #allocation1 [shape = 'u32[144,128]{1,0:T(1,128)}', space=vmem, size = 0x12000, scoped, tag = 'internal scratch']
  %s0 = inlined_call_operand.vmem [shape: f32[2,8,16], index: 0, kind: input, shape index: {}]
  %s1 = inlined_call_operand.vmem [shape: f32[48,32], index: 1, kind: input, shape index: {}]
  %s2 = inlined_call_operand.vmem [shape: f32[1,32], index: 2, kind: input, shape index: {}]
  %s3 = inlined_call_operand.vmem [shape: f32[64,32], index: 3, kind: input, shape index: {}]
  %s4 = inlined_call_operand.vmem [shape: f32[1,32], index: 4, kind: input, shape index: {}]
  %s5 = inlined_call_operand.hbm [shape: f32[2,32], index: 5, kind: output, shape index: {}]
  %s6 = sld [smem:[#allocation0]]
  $region30: #{many_to_one_forward.1} parent=0
    _
  %s8 = ssub.s32 1, %s6
  %s9 = scalar_select 0, %s8, %s6
  $region1: #{many_to_one_forward.1} parent=0
    #allocation2 [shape = 'u8[1024]{0}', space=vmem, size = 0x400, scoped, tag = 'output window, operand 0, single buffered']
    #allocation3 [shape = 's32[1]{0}', space=sflag, size = 0x4, scoped, tag = 'scoped memory for many_to_one_forward.1']
    %10 = vsyncpa [#allocation3], 0
    // Predicated region
    $region2: #{many_to_one_forward.1} parent=1 // pred_check
      _
    $region3: #{many_to_one_forward.1} parent=1 // pred_check_branch
      %12 = sbr.rel (0) target = $region5
    $region4: #{many_to_one_forward.1} parent=1 // pred_region
      _
    $region5: #{many_to_one_forward.1} parent=1 // pred_fallthru
      _
    // Predicated region
    $region6: #{many_to_one_forward.1} parent=1 // pred_check
      _
    $region7: #{many_to_one_forward.1} parent=1 // pred_check_branch
      %14 = sbr.rel (0) target = $region9
    $region8: #{many_to_one_forward.1} parent=1 // pred_region
      _
    $region9: #{many_to_one_forward.1} parent=1 // pred_fallthru
      _
    // Predicated region
    $region10: #{many_to_one_forward.1} parent=1 // pred_check
      _
    $region11: #{many_to_one_forward.1} parent=1 // pred_check_branch
      %16 = sbr.rel (0) target = $region13
    $region12: #{many_to_one_forward.1} parent=1 // pred_region
      _
    $region13: #{many_to_one_forward.1} parent=1 // pred_fallthru
      _
    // Predicated region
    $region14: #{many_to_one_forward.1} parent=1 // pred_check
      _
    $region15: #{many_to_one_forward.1} parent=1 // pred_check_branch
      %18 = sbr.rel (0) target = $region17
    $region16: #{many_to_one_forward.1} parent=1 // pred_region
      _
    $region17: #{many_to_one_forward.1} parent=1 // pred_fallthru
      _
    // Predicated region
    $region18: #{many_to_one_forward.1} parent=1 // pred_check
      _
    $region19: #{many_to_one_forward.1} parent=1 // pred_check_branch
      %20 = sbr.rel (0) target = $region21
    $region20: #{many_to_one_forward.1} parent=1 // pred_region
      _
    $region21: #{many_to_one_forward.1} parent=1 // pred_fallthru
      _
    %v21 = vld [vmem:[%s1] sm:$0xff]
    %v22 = vld [vmem:[%s1 + $0x8] sm:$0xff]
    %v23 = vld [vmem:[%s1 + $0x10] sm:$0xff]
    %v24 = vld [vmem:[%s1 + $0x18] sm:$0xff]
    %v25 = vld [vmem:[%s1 + $0x20] sm:$0xff]
    %v26 = vld [vmem:[%s1 + $0x28] sm:$0xff]
    %v27 = vld [vmem:[%s3] sm:$0xff]
    %v28 = vld [vmem:[%s3 + $0x8] sm:$0xff]
    %v29 = vld [vmem:[%s3 + $0x10] sm:$0xff]
    %v30 = vld [vmem:[%s3 + $0x18] sm:$0xff]
    %v31 = vld [vmem:[%s3 + $0x20] sm:$0xff]
    %v32 = vld [vmem:[%s3 + $0x28] sm:$0xff]
    %v33 = vld [vmem:[%s3 + $0x30] sm:$0xff]
    %v34 = vld [vmem:[%s3 + $0x38] sm:$0xff]
    %v35 = vld [vmem:[%s2] sm:$0x1]
    %v36 = vld [vmem:[%s4] sm:$0x1]
    %v37 = vld [vmem:[%s0] sm:$0x1]
    %v38 = vld [vmem:[%s0 + $0x8] sm:$0x1]
    %v41 = vrot.slane %v38, 7
    %vm42 = vcmask 1041409
    %v43 = vsel %vm42, %v41, %v37
    %44 = vrot.lane.b32.xlu0 %v43, 32
    %v45 = vpop.permute.xlu0 %44
    %vm47 = vcmask 261120
    %v48 = vsel %vm47, 0.0, %v45
    %v50 = vlaneseq
    %v51 = vshrl.u32 %v50, 7
    %v52 = vsub.s32 0, %v51
    %v53 = vrot.slane %v35, %v52
    %vm55 = vcmask 392192
    %v57 = vsel %vm55, %v48, 0
    %59 = vmatprep.subr.mxu0 0.0
    %60 = vmatpush1.msra.mxu0 %v21
    %61 = vmatprep.subr.mxu0 0.0
    %62 = vmatpush1.msra.mxu0 %v22
    %63 = vmatprep.subr.mxu0 0.0
    %64 = vmatpush1.msra.mxu0 %v23
    %65 = vmatprep.subr.mxu0 0.0
    %66 = vmatpush1.msra.mxu0 %v24
    %67 = vmatprep.subr.mxu0 0.0
    %68 = vmatpush1.msra.mxu0 %v25
    %69 = vmatprep.subr.mxu0 0.0
    %70 = vmatpush1.msra.mxu0 %v26
    %71 = vmatprep.subr.mxu0 0.0
    %72 = vmatpush1.msra.mxu0 0.0
    %73 = vmatprep.subr.mxu0 0.0
    %74 = vmatpush1.msra.mxu0 0.0
    %75 = vmatprep.subr.mxu0 0.0
    %76 = vmatpush1.msra.mxu0 0.0
    %77 = vmatprep.subr.mxu0 0.0
    %78 = vmatpush1.msra.mxu0 0.0
    %79 = vmatprep.subr.mxu0 0.0
    %80 = vmatpush1.msra.mxu0 0.0
    %81 = vmatprep.subr.mxu0 0.0
    %82 = vmatpush1.msra.mxu0 0.0
    %83 = vmatprep.subr.mxu0 0.0
    %84 = vmatpush1.msra.mxu0 0.0
    %85 = vmatprep.subr.mxu0 0.0
    %86 = vmatpush1.msra.mxu0 0.0
    %87 = vmatprep.subr.mxu0 0.0
    %88 = vmatpush1.msra.mxu0 0.0
    %89 = vmatprep.subr.mxu0 0.0
    %90 = vmatpush1.msra.mxu0 0.0
    %91 = vmatprep.subr.mxu0 0.0
    %92 = vmatpush1.msra.mxu0 0.0
    %93 = vmatprep.subr.mxu0 0.0
    %94 = vmatpush1.msra.mxu0 0.0
    %95 = vmatprep.subr.mxu0 0.0
    %96 = vmatpush1.msra.mxu0 0.0
    %97 = vmatprep.subr.mxu0 0.0
    %98 = vmatpush1.msra.mxu0 0.0
    %99 = vmatprep.subr.mxu0 0.0
    %100 = vmatpush1.msra.mxu0 0.0
    %101 = vmatprep.subr.mxu0 0.0
    %102 = vmatpush1.msra.mxu0 0.0
    %103 = vmatprep.subr.mxu0 0.0
    %104 = vmatpush1.msra.mxu0 0.0
    %105 = vmatprep.subr.mxu0 0.0
    %106 = vmatpush1.msra.mxu0 0.0
    %107 = vmatprep.subr.mxu0 0.0
    %108 = vmatpush1.msra.mxu0 0.0
    %109 = vmatprep.subr.mxu0 0.0
    %110 = vmatpush1.msra.mxu0 0.0
    %111 = vmatprep.subr.mxu0 0.0
    %112 = vmatpush1.msra.mxu0 0.0
    %113 = vmatprep.subr.mxu0 0.0
    %114 = vmatpush1.msra.mxu0 0.0
    %115 = vmatprep.subr.mxu0 0.0
    %116 = vmatpush1.msra.mxu0 0.0
    %117 = vmatprep.subr.mxu0 0.0
    %118 = vmatpush1.msra.mxu0 0.0
    %119 = vmatprep.subr.mxu0 0.0
    %120 = vmatpush1.msra.mxu0 0.0
    %121 = vmatprep.subr.mxu0 0.0
    %122 = vmatpush1.msra.mxu0 0.0
    %123 = vmatprep.mubr.f32.mxu0 0.0
    %124 = vmatmul.mubr.f32.gmra.mrb[0].mxu0 %v57
    %v125 = vpop.f32.mrb[0].mxu0
    %v126 = vadd.f32 %v53, %v125
    %v127 = vpop.f32.mrb[0].mxu0
    %128 = vdwg.mxu0
    %v129 = vtanh.pop %v126
    %v130 = vld [vmem:[%s0 + $0x1] sm:$0x1]
    %v131 = vld [vmem:[%s0 + $0x9] sm:$0x1]
    %v134 = vrot.slane %v131, 7
    %v135 = vsel %vm42, %v134, %v130
    %136 = vrot.lane.b32.xlu0 %v135, 32
    %v137 = vpop.permute.xlu0 %136
    %v139 = vsel %vm47, %v129, %v137
    %v141 = vsel %vm55, %v139, 0
    %143 = vmatprep.subr.mxu0 0.0
    %144 = vmatpush1.msra.mxu0 %v21
    %145 = vmatprep.subr.mxu0 0.0
    %146 = vmatpush1.msra.mxu0 %v22
    %147 = vmatprep.subr.mxu0 0.0
    %148 = vmatpush1.msra.mxu0 %v23
    %149 = vmatprep.subr.mxu0 0.0
    %150 = vmatpush1.msra.mxu0 %v24
    %151 = vmatprep.subr.mxu0 0.0
    %152 = vmatpush1.msra.mxu0 %v25
    %153 = vmatprep.subr.mxu0 0.0
    %154 = vmatpush1.msra.mxu0 %v26
    %155 = vmatprep.subr.mxu0 0.0
    %156 = vmatpush1.msra.mxu0 0.0
    %157 = vmatprep.subr.mxu0 0.0
    %158 = vmatpush1.msra.mxu0 0.0
    %159 = vmatprep.subr.mxu0 0.0
    %160 = vmatpush1.msra.mxu0 0.0
    %161 = vmatprep.subr.mxu0 0.0
    %162 = vmatpush1.msra.mxu0 0.0
    %163 = vmatprep.subr.mxu0 0.0
    %164 = vmatpush1.msra.mxu0 0.0
    %165 = vmatprep.subr.mxu0 0.0
    %166 = vmatpush1.msra.mxu0 0.0
    %167 = vmatprep.subr.mxu0 0.0
    %168 = vmatpush1.msra.mxu0 0.0
    %169 = vmatprep.subr.mxu0 0.0
    %170 = vmatpush1.msra.mxu0 0.0
    %171 = vmatprep.subr.mxu0 0.0
    %172 = vmatpush1.msra.mxu0 0.0
    %173 = vmatprep.subr.mxu0 0.0
    %174 = vmatpush1.msra.mxu0 0.0
    %175 = vmatprep.subr.mxu0 0.0
    %176 = vmatpush1.msra.mxu0 0.0
    %177 = vmatprep.subr.mxu0 0.0
    %178 = vmatpush1.msra.mxu0 0.0
    %179 = vmatprep.subr.mxu0 0.0
    %180 = vmatpush1.msra.mxu0 0.0
    %181 = vmatprep.subr.mxu0 0.0
    %182 = vmatpush1.msra.mxu0 0.0
    %183 = vmatprep.subr.mxu0 0.0
    %184 = vmatpush1.msra.mxu0 0.0
    %185 = vmatprep.subr.mxu0 0.0
    %186 = vmatpush1.msra.mxu0 0.0
    %187 = vmatprep.subr.mxu0 0.0
    %188 = vmatpush1.msra.mxu0 0.0
    %189 = vmatprep.subr.mxu0 0.0
    %190 = vmatpush1.msra.mxu0 0.0
    %191 = vmatprep.subr.mxu0 0.0
    %192 = vmatpush1.msra.mxu0 0.0
    %193 = vmatprep.subr.mxu0 0.0
    %194 = vmatpush1.msra.mxu0 0.0
    %195 = vmatprep.subr.mxu0 0.0
    %196 = vmatpush1.msra.mxu0 0.0
    %197 = vmatprep.subr.mxu0 0.0
    %198 = vmatpush1.msra.mxu0 0.0
    %199 = vmatprep.subr.mxu0 0.0
    %200 = vmatpush1.msra.mxu0 0.0
    %201 = vmatprep.subr.mxu0 0.0
    %202 = vmatpush1.msra.mxu0 0.0
    %203 = vmatprep.subr.mxu0 0.0
    %204 = vmatpush1.msra.mxu0 0.0
    %205 = vmatprep.subr.mxu0 0.0
    %206 = vmatpush1.msra.mxu0 0.0
    %207 = vmatprep.mubr.f32.mxu0 0.0
    %208 = vmatmul.mubr.f32.gmra.mrb[0].mxu0 %v141
    %v209 = vpop.f32.mrb[0].mxu0
    %v210 = vadd.f32 %v53, %v209
    %v211 = vpop.f32.mrb[0].mxu0
    %212 = vdwg.mxu0
    %v213 = vtanh.pop %v210
    %215 = vrot.lane.b32.xlu0 %v129, 32
    %v216 = vpop.permute.xlu0 %215
    %v218 = vsel %vm47, 0.0, %v216
    %v220 = vlaneseq
    %v221 = vshrl.u32 %v220, 7
    %v222 = vsub.s32 0, %v221
    %v223 = vrot.slane %v36, %v222
    %vm225 = vcmask 523264
    %v227 = vsel %vm225, %v218, 0
    %229 = vmatprep.subr.mxu0 0.0
    %230 = vmatpush1.msra.mxu0 %v27
    %231 = vmatprep.subr.mxu0 0.0
    %232 = vmatpush1.msra.mxu0 %v28
    %233 = vmatprep.subr.mxu0 0.0
    %234 = vmatpush1.msra.mxu0 %v29
    %235 = vmatprep.subr.mxu0 0.0
    %236 = vmatpush1.msra.mxu0 %v30
    %237 = vmatprep.subr.mxu0 0.0
    %238 = vmatpush1.msra.mxu0 %v31
    %239 = vmatprep.subr.mxu0 0.0
    %240 = vmatpush1.msra.mxu0 %v32
    %241 = vmatprep.subr.mxu0 0.0
    %242 = vmatpush1.msra.mxu0 %v33
    %243 = vmatprep.subr.mxu0 0.0
    %244 = vmatpush1.msra.mxu0 %v34
    %245 = vmatprep.subr.mxu0 0.0
    %246 = vmatpush1.msra.mxu0 0.0
    %247 = vmatprep.subr.mxu0 0.0
    %248 = vmatpush1.msra.mxu0 0.0
    %249 = vmatprep.subr.mxu0 0.0
    %250 = vmatpush1.msra.mxu0 0.0
    %251 = vmatprep.subr.mxu0 0.0
    %252 = vmatpush1.msra.mxu0 0.0
    %253 = vmatprep.subr.mxu0 0.0
    %254 = vmatpush1.msra.mxu0 0.0
    %255 = vmatprep.subr.mxu0 0.0
    %256 = vmatpush1.msra.mxu0 0.0
    %257 = vmatprep.subr.mxu0 0.0
    %258 = vmatpush1.msra.mxu0 0.0
    %259 = vmatprep.subr.mxu0 0.0
    %260 = vmatpush1.msra.mxu0 0.0
    %261 = vmatprep.subr.mxu0 0.0
    %262 = vmatpush1.msra.mxu0 0.0
    %263 = vmatprep.subr.mxu0 0.0
    %264 = vmatpush1.msra.mxu0 0.0
    %265 = vmatprep.subr.mxu0 0.0
    %266 = vmatpush1.msra.mxu0 0.0
    %267 = vmatprep.subr.mxu0 0.0
    %268 = vmatpush1.msra.mxu0 0.0
    %269 = vmatprep.subr.mxu0 0.0
    %270 = vmatpush1.msra.mxu0 0.0
    %271 = vmatprep.subr.mxu0 0.0
    %272 = vmatpush1.msra.mxu0 0.0
    %273 = vmatprep.subr.mxu0 0.0
    %274 = vmatpush1.msra.mxu0 0.0
    %275 = vmatprep.subr.mxu0 0.0
    %276 = vmatpush1.msra.mxu0 0.0
    %277 = vmatprep.subr.mxu0 0.0
    %278 = vmatpush1.msra.mxu0 0.0
    %279 = vmatprep.subr.mxu0 0.0
    %280 = vmatpush1.msra.mxu0 0.0
    %281 = vmatprep.subr.mxu0 0.0
    %282 = vmatpush1.msra.mxu0 0.0
    %283 = vmatprep.subr.mxu0 0.0
    %284 = vmatpush1.msra.mxu0 0.0
    %285 = vmatprep.subr.mxu0 0.0
    %286 = vmatpush1.msra.mxu0 0.0
    %287 = vmatprep.subr.mxu0 0.0
    %288 = vmatpush1.msra.mxu0 0.0
    %289 = vmatprep.subr.mxu0 0.0
    %290 = vmatpush1.msra.mxu0 0.0
    %291 = vmatprep.subr.mxu0 0.0
    %292 = vmatpush1.msra.mxu0 0.0
    %293 = vmatprep.mubr.f32.mxu0 0.0
    %294 = vmatmul.mubr.f32.gmra.mrb[0].mxu0 %v227
    %v295 = vpop.f32.mrb[0].mxu0
    %v296 = vadd.f32 %v223, %v295
    %v297 = vpop.f32.mrb[0].mxu0
    %298 = vdwg.mxu0
    %v299 = vtanh.pop %v296
    %v300 = vld [vmem:[%s0 + $0x2] sm:$0x1]
    %v301 = vld [vmem:[%s0 + $0xa] sm:$0x1]
    %v304 = vrot.slane %v301, 7
    %v305 = vsel %vm42, %v304, %v300
    %306 = vrot.lane.b32.xlu0 %v305, 32
    %v307 = vpop.permute.xlu0 %306
    %v309 = vsel %vm47, %v213, %v307
    %v311 = vsel %vm55, %v309, 0
    %313 = vmatprep.subr.mxu0 0.0
    %314 = vmatpush1.msra.mxu0 %v21
    %315 = vmatprep.subr.mxu0 0.0
    %316 = vmatpush1.msra.mxu0 %v22
    %317 = vmatprep.subr.mxu0 0.0
    %318 = vmatpush1.msra.mxu0 %v23
    %319 = vmatprep.subr.mxu0 0.0
    %320 = vmatpush1.msra.mxu0 %v24
    %321 = vmatprep.subr.mxu0 0.0
    %322 = vmatpush1.msra.mxu0 %v25
    %323 = vmatprep.subr.mxu0 0.0
    %324 = vmatpush1.msra.mxu0 %v26
    %325 = vmatprep.subr.mxu0 0.0
    %326 = vmatpush1.msra.mxu0 0.0
    %327 = vmatprep.subr.mxu0 0.0
    %328 = vmatpush1.msra.mxu0 0.0
    %329 = vmatprep.subr.mxu0 0.0
    %330 = vmatpush1.msra.mxu0 0.0
    %331 = vmatprep.subr.mxu0 0.0
    %332 = vmatpush1.msra.mxu0 0.0
    %333 = vmatprep.subr.mxu0 0.0
    %334 = vmatpush1.msra.mxu0 0.0
    %335 = vmatprep.subr.mxu0 0.0
    %336 = vmatpush1.msra.mxu0 0.0
    %337 = vmatprep.subr.mxu0 0.0
    %338 = vmatpush1.msra.mxu0 0.0
    %339 = vmatprep.subr.mxu0 0.0
    %340 = vmatpush1.msra.mxu0 0.0
    %341 = vmatprep.subr.mxu0 0.0
    %342 = vmatpush1.msra.mxu0 0.0
    %343 = vmatprep.subr.mxu0 0.0
    %344 = vmatpush1.msra.mxu0 0.0
    %345 = vmatprep.subr.mxu0 0.0
    %346 = vmatpush1.msra.mxu0 0.0
    %347 = vmatprep.subr.mxu0 0.0
    %348 = vmatpush1.msra.mxu0 0.0
    %349 = vmatprep.subr.mxu0 0.0
    %350 = vmatpush1.msra.mxu0 0.0
    %351 = vmatprep.subr.mxu0 0.0
    %352 = vmatpush1.msra.mxu0 0.0
    %353 = vmatprep.subr.mxu0 0.0
    %354 = vmatpush1.msra.mxu0 0.0
    %355 = vmatprep.subr.mxu0 0.0
    %356 = vmatpush1.msra.mxu0 0.0
    %357 = vmatprep.subr.mxu0 0.0
    %358 = vmatpush1.msra.mxu0 0.0
    %359 = vmatprep.subr.mxu0 0.0
    %360 = vmatpush1.msra.mxu0 0.0
    %361 = vmatprep.subr.mxu0 0.0
    %362 = vmatpush1.msra.mxu0 0.0
    %363 = vmatprep.subr.mxu0 0.0
    %364 = vmatpush1.msra.mxu0 0.0
    %365 = vmatprep.subr.mxu0 0.0
    %366 = vmatpush1.msra.mxu0 0.0
    %367 = vmatprep.subr.mxu0 0.0
    %368 = vmatpush1.msra.mxu0 0.0
    %369 = vmatprep.subr.mxu0 0.0
    %370 = vmatpush1.msra.mxu0 0.0
    %371 = vmatprep.subr.mxu0 0.0
    %372 = vmatpush1.msra.mxu0 0.0
    %373 = vmatprep.subr.mxu0 0.0
    %374 = vmatpush1.msra.mxu0 0.0
    %375 = vmatprep.subr.mxu0 0.0
    %376 = vmatpush1.msra.mxu0 0.0
    %377 = vmatprep.mubr.f32.mxu0 0.0
    %378 = vmatmul.mubr.f32.gmra.mrb[0].mxu0 %v311
    %v379 = vpop.f32.mrb[0].mxu0
    %v380 = vadd.f32 %v53, %v379
    %v381 = vpop.f32.mrb[0].mxu0
    %382 = vdwg.mxu0
    %v383 = vtanh.pop %v380
    %385 = vrot.lane.b32.xlu0 %v213, 32
    %v386 = vpop.permute.xlu0 %385
    %v388 = vsel %vm47, %v299, %v386
    %v390 = vsel %vm225, %v388, 0
    %392 = vmatprep.subr.mxu0 0.0
    %393 = vmatpush1.msra.mxu0 %v27
    %394 = vmatprep.subr.mxu0 0.0
    %395 = vmatpush1.msra.mxu0 %v28
    %396 = vmatprep.subr.mxu0 0.0
    %397 = vmatpush1.msra.mxu0 %v29
    %398 = vmatprep.subr.mxu0 0.0
    %399 = vmatpush1.msra.mxu0 %v30
    %400 = vmatprep.subr.mxu0 0.0
    %401 = vmatpush1.msra.mxu0 %v31
    %402 = vmatprep.subr.mxu0 0.0
    %403 = vmatpush1.msra.mxu0 %v32
    %404 = vmatprep.subr.mxu0 0.0
    %405 = vmatpush1.msra.mxu0 %v33
    %406 = vmatprep.subr.mxu0 0.0
    %407 = vmatpush1.msra.mxu0 %v34
    %408 = vmatprep.subr.mxu0 0.0
    %409 = vmatpush1.msra.mxu0 0.0
    %410 = vmatprep.subr.mxu0 0.0
    %411 = vmatpush1.msra.mxu0 0.0
    %412 = vmatprep.subr.mxu0 0.0
    %413 = vmatpush1.msra.mxu0 0.0
    %414 = vmatprep.subr.mxu0 0.0
    %415 = vmatpush1.msra.mxu0 0.0
    %416 = vmatprep.subr.mxu0 0.0
    %417 = vmatpush1.msra.mxu0 0.0
    %418 = vmatprep.subr.mxu0 0.0
    %419 = vmatpush1.msra.mxu0 0.0
    %420 = vmatprep.subr.mxu0 0.0
    %421 = vmatpush1.msra.mxu0 0.0
    %422 = vmatprep.subr.mxu0 0.0
    %423 = vmatpush1.msra.mxu0 0.0
    %424 = vmatprep.subr.mxu0 0.0
    %425 = vmatpush1.msra.mxu0 0.0
    %426 = vmatprep.subr.mxu0 0.0
    %427 = vmatpush1.msra.mxu0 0.0
    %428 = vmatprep.subr.mxu0 0.0
    %429 = vmatpush1.msra.mxu0 0.0
    %430 = vmatprep.subr.mxu0 0.0
    %431 = vmatpush1.msra.mxu0 0.0
    %432 = vmatprep.subr.mxu0 0.0
    %433 = vmatpush1.msra.mxu0 0.0
    %434 = vmatprep.subr.mxu0 0.0
    %435 = vmatpush1.msra.mxu0 0.0
    %436 = vmatprep.subr.mxu0 0.0
    %437 = vmatpush1.msra.mxu0 0.0
    %438 = vmatprep.subr.mxu0 0.0
    %439 = vmatpush1.msra.mxu0 0.0
    %440 = vmatprep.subr.mxu0 0.0
    %441 = vmatpush1.msra.mxu0 0.0
    %442 = vmatprep.subr.mxu0 0.0
    %443 = vmatpush1.msra.mxu0 0.0
    %444 = vmatprep.subr.mxu0 0.0
    %445 = vmatpush1.msra.mxu0 0.0
    %446 = vmatprep.subr.mxu0 0.0
    %447 = vmatpush1.msra.mxu0 0.0
    %448 = vmatprep.subr.mxu0 0.0
    %449 = vmatpush1.msra.mxu0 0.0
    %450 = vmatprep.subr.mxu0 0.0
    %451 = vmatpush1.msra.mxu0 0.0
    %452 = vmatprep.subr.mxu0 0.0
    %453 = vmatpush1.msra.mxu0 0.0
    %454 = vmatprep.subr.mxu0 0.0
    %455 = vmatpush1.msra.mxu0 0.0
    %456 = vmatprep.mubr.f32.mxu0 0.0
    %457 = vmatmul.mubr.f32.gmra.mrb[0].mxu0 %v390
    %v458 = vpop.f32.mrb[0].mxu0
    %v459 = vadd.f32 %v223, %v458
    %v460 = vpop.f32.mrb[0].mxu0
    %461 = vdwg.mxu0
    %v462 = vtanh.pop %v459
    %v463 = vld [vmem:[%s0 + $0x3] sm:$0x1]
    %v464 = vld [vmem:[%s0 + $0xb] sm:$0x1]
    %v467 = vrot.slane %v464, 7
    %v468 = vsel %vm42, %v467, %v463
    %469 = vrot.lane.b32.xlu0 %v468, 32
    %v470 = vpop.permute.xlu0 %469
    %v472 = vsel %vm47, %v383, %v470
    %v474 = vsel %vm55, %v472, 0
    %476 = vmatprep.subr.mxu0 0.0
    %477 = vmatpush1.msra.mxu0 %v21
    %478 = vmatprep.subr.mxu0 0.0
    %479 = vmatpush1.msra.mxu0 %v22
    %480 = vmatprep.subr.mxu0 0.0
    %481 = vmatpush1.msra.mxu0 %v23
    %482 = vmatprep.subr.mxu0 0.0
    %483 = vmatpush1.msra.mxu0 %v24
    %484 = vmatprep.subr.mxu0 0.0
    %485 = vmatpush1.msra.mxu0 %v25
    %486 = vmatprep.subr.mxu0 0.0
    %487 = vmatpush1.msra.mxu0 %v26
    %488 = vmatprep.subr.mxu0 0.0
    %489 = vmatpush1.msra.mxu0 0.0
    %490 = vmatprep.subr.mxu0 0.0
    %491 = vmatpush1.msra.mxu0 0.0
    %492 = vmatprep.subr.mxu0 0.0
    %493 = vmatpush1.msra.mxu0 0.0
    %494 = vmatprep.subr.mxu0 0.0
    %495 = vmatpush1.msra.mxu0 0.0
    %496 = vmatprep.subr.mxu0 0.0
    %497 = vmatpush1.msra.mxu0 0.0
    %498 = vmatprep.subr.mxu0 0.0
    %499 = vmatpush1.msra.mxu0 0.0
    %500 = vmatprep.subr.mxu0 0.0
    %501 = vmatpush1.msra.mxu0 0.0
    %502 = vmatprep.subr.mxu0 0.0
    %503 = vmatpush1.msra.mxu0 0.0
    %504 = vmatprep.subr.mxu0 0.0
    %505 = vmatpush1.msra.mxu0 0.0
    %506 = vmatprep.subr.mxu0 0.0
    %507 = vmatpush1.msra.mxu0 0.0
    %508 = vmatprep.subr.mxu0 0.0
    %509 = vmatpush1.msra.mxu0 0.0
    %510 = vmatprep.subr.mxu0 0.0
    %511 = vmatpush1.msra.mxu0 0.0
    %512 = vmatprep.subr.mxu0 0.0
    %513 = vmatpush1.msra.mxu0 0.0
    %514 = vmatprep.subr.mxu0 0.0
    %515 = vmatpush1.msra.mxu0 0.0
    %516 = vmatprep.subr.mxu0 0.0
    %517 = vmatpush1.msra.mxu0 0.0
    %518 = vmatprep.subr.mxu0 0.0
    %519 = vmatpush1.msra.mxu0 0.0
    %520 = vmatprep.subr.mxu0 0.0
    %521 = vmatpush1.msra.mxu0 0.0
    %522 = vmatprep.subr.mxu0 0.0
    %523 = vmatpush1.msra.mxu0 0.0
    %524 = vmatprep.subr.mxu0 0.0
    %525 = vmatpush1.msra.mxu0 0.0
    %526 = vmatprep.subr.mxu0 0.0
    %527 = vmatpush1.msra.mxu0 0.0
    %528 = vmatprep.subr.mxu0 0.0
    %529 = vmatpush1.msra.mxu0 0.0
    %530 = vmatprep.subr.mxu0 0.0
    %531 = vmatpush1.msra.mxu0 0.0
    %532 = vmatprep.subr.mxu0 0.0
    %533 = vmatpush1.msra.mxu0 0.0
    %534 = vmatprep.subr.mxu0 0.0
    %535 = vmatpush1.msra.mxu0 0.0
    %536 = vmatprep.subr.mxu0 0.0
    %537 = vmatpush1.msra.mxu0 0.0
    %538 = vmatprep.subr.mxu0 0.0
    %539 = vmatpush1.msra.mxu0 0.0
    %540 = vmatprep.mubr.f32.mxu0 0.0
    %541 = vmatmul.mubr.f32.gmra.mrb[0].mxu0 %v474
    %v542 = vpop.f32.mrb[0].mxu0
    %v543 = vadd.f32 %v53, %v542
    %v544 = vpop.f32.mrb[0].mxu0
    %545 = vdwg.mxu0
    %v546 = vtanh.pop %v543
    %548 = vrot.lane.b32.xlu0 %v383, 32
    %v549 = vpop.permute.xlu0 %548
    %v551 = vsel %vm47, %v462, %v549
    %v553 = vsel %vm225, %v551, 0
    %555 = vmatprep.subr.mxu0 0.0
    %556 = vmatpush1.msra.mxu0 %v27
    %557 = vmatprep.subr.mxu0 0.0
    %558 = vmatpush1.msra.mxu0 %v28
    %559 = vmatprep.subr.mxu0 0.0
    %560 = vmatpush1.msra.mxu0 %v29
    %561 = vmatprep.subr.mxu0 0.0
    %562 = vmatpush1.msra.mxu0 %v30
    %563 = vmatprep.subr.mxu0 0.0
    %564 = vmatpush1.msra.mxu0 %v31
    %565 = vmatprep.subr.mxu0 0.0
    %566 = vmatpush1.msra.mxu0 %v32
    %567 = vmatprep.subr.mxu0 0.0
    %568 = vmatpush1.msra.mxu0 %v33
    %569 = vmatprep.subr.mxu0 0.0
    %570 = vmatpush1.msra.mxu0 %v34
    %571 = vmatprep.subr.mxu0 0.0
    %572 = vmatpush1.msra.mxu0 0.0
    %573 = vmatprep.subr.mxu0 0.0
    %574 = vmatpush1.msra.mxu0 0.0
    %575 = vmatprep.subr.mxu0 0.0
    %576 = vmatpush1.msra.mxu0 0.0
    %577 = vmatprep.subr.mxu0 0.0
    %578 = vmatpush1.msra.mxu0 0.0
    %579 = vmatprep.subr.mxu0 0.0
    %580 = vmatpush1.msra.mxu0 0.0
    %581 = vmatprep.subr.mxu0 0.0
    %582 = vmatpush1.msra.mxu0 0.0
    %583 = vmatprep.subr.mxu0 0.0
    %584 = vmatpush1.msra.mxu0 0.0
    %585 = vmatprep.subr.mxu0 0.0
    %586 = vmatpush1.msra.mxu0 0.0
    %587 = vmatprep.subr.mxu0 0.0
    %588 = vmatpush1.msra.mxu0 0.0
    %589 = vmatprep.subr.mxu0 0.0
    %590 = vmatpush1.msra.mxu0 0.0
    %591 = vmatprep.subr.mxu0 0.0
    %592 = vmatpush1.msra.mxu0 0.0
    %593 = vmatprep.subr.mxu0 0.0
    %594 = vmatpush1.msra.mxu0 0.0
    %595 = vmatprep.subr.mxu0 0.0
    %596 = vmatpush1.msra.mxu0 0.0
    %597 = vmatprep.subr.mxu0 0.0
    %598 = vmatpush1.msra.mxu0 0.0
    %599 = vmatprep.subr.mxu0 0.0
    %600 = vmatpush1.msra.mxu0 0.0
    %601 = vmatprep.subr.mxu0 0.0
    %602 = vmatpush1.msra.mxu0 0.0
    %603 = vmatprep.subr.mxu0 0.0
    %604 = vmatpush1.msra.mxu0 0.0
    %605 = vmatprep.subr.mxu0 0.0
    %606 = vmatpush1.msra.mxu0 0.0
    %607 = vmatprep.subr.mxu0 0.0
    %608 = vmatpush1.msra.mxu0 0.0
    %609 = vmatprep.subr.mxu0 0.0
    %610 = vmatpush1.msra.mxu0 0.0
    %611 = vmatprep.subr.mxu0 0.0
    %612 = vmatpush1.msra.mxu0 0.0
    %613 = vmatprep.subr.mxu0 0.0
    %614 = vmatpush1.msra.mxu0 0.0
    %615 = vmatprep.subr.mxu0 0.0
    %616 = vmatpush1.msra.mxu0 0.0
    %617 = vmatprep.subr.mxu0 0.0
    %618 = vmatpush1.msra.mxu0 0.0
    %619 = vmatprep.mubr.f32.mxu0 0.0
    %620 = vmatmul.mubr.f32.gmra.mrb[0].mxu0 %v553
    %v621 = vpop.f32.mrb[0].mxu0
    %v622 = vadd.f32 %v223, %v621
    %v623 = vpop.f32.mrb[0].mxu0
    %624 = vdwg.mxu0
    %v625 = vtanh.pop %v622
    %v626 = vld [vmem:[%s0 + $0x4] sm:$0x1]
    %v627 = vld [vmem:[%s0 + $0xc] sm:$0x1]
    %v630 = vrot.slane %v627, 7
    %v631 = vsel %vm42, %v630, %v626
    %632 = vrot.lane.b32.xlu0 %v631, 32
    %v633 = vpop.permute.xlu0 %632
    %v635 = vsel %vm47, %v546, %v633
    %v637 = vsel %vm55, %v635, 0
    %639 = vmatprep.subr.mxu0 0.0
    %640 = vmatpush1.msra.mxu0 %v21
    %641 = vmatprep.subr.mxu0 0.0
    %642 = vmatpush1.msra.mxu0 %v22
    %643 = vmatprep.subr.mxu0 0.0
    %644 = vmatpush1.msra.mxu0 %v23
    %645 = vmatprep.subr.mxu0 0.0
    %646 = vmatpush1.msra.mxu0 %v24
    %647 = vmatprep.subr.mxu0 0.0
    %648 = vmatpush1.msra.mxu0 %v25
    %649 = vmatprep.subr.mxu0 0.0
    %650 = vmatpush1.msra.mxu0 %v26
    %651 = vmatprep.subr.mxu0 0.0
    %652 = vmatpush1.msra.mxu0 0.0
    %653 = vmatprep.subr.mxu0 0.0
    %654 = vmatpush1.msra.mxu0 0.0
    %655 = vmatprep.subr.mxu0 0.0
    %656 = vmatpush1.msra.mxu0 0.0
    %657 = vmatprep.subr.mxu0 0.0
    %658 = vmatpush1.msra.mxu0 0.0
    %659 = vmatprep.subr.mxu0 0.0
    %660 = vmatpush1.msra.mxu0 0.0
    %661 = vmatprep.subr.mxu0 0.0
    %662 = vmatpush1.msra.mxu0 0.0
    %663 = vmatprep.subr.mxu0 0.0
    %664 = vmatpush1.msra.mxu0 0.0
    %665 = vmatprep.subr.mxu0 0.0
    %666 = vmatpush1.msra.mxu0 0.0
    %667 = vmatprep.subr.mxu0 0.0
    %668 = vmatpush1.msra.mxu0 0.0
    %669 = vmatprep.subr.mxu0 0.0
    %670 = vmatpush1.msra.mxu0 0.0
    %671 = vmatprep.subr.mxu0 0.0
    %672 = vmatpush1.msra.mxu0 0.0
    %673 = vmatprep.subr.mxu0 0.0
    %674 = vmatpush1.msra.mxu0 0.0
    %675 = vmatprep.subr.mxu0 0.0
    %676 = vmatpush1.msra.mxu0 0.0
    %677 = vmatprep.subr.mxu0 0.0
    %678 = vmatpush1.msra.mxu0 0.0
    %679 = vmatprep.subr.mxu0 0.0
    %680 = vmatpush1.msra.mxu0 0.0
    %681 = vmatprep.subr.mxu0 0.0
    %682 = vmatpush1.msra.mxu0 0.0
    %683 = vmatprep.subr.mxu0 0.0
    %684 = vmatpush1.msra.mxu0 0.0
    %685 = vmatprep.subr.mxu0 0.0
    %686 = vmatpush1.msra.mxu0 0.0
    %687 = vmatprep.subr.mxu0 0.0
    %688 = vmatpush1.msra.mxu0 0.0
    %689 = vmatprep.subr.mxu0 0.0
    %690 = vmatpush1.msra.mxu0 0.0
    %691 = vmatprep.subr.mxu0 0.0
    %692 = vmatpush1.msra.mxu0 0.0
    %693 = vmatprep.subr.mxu0 0.0
    %694 = vmatpush1.msra.mxu0 0.0
    %695 = vmatprep.subr.mxu0 0.0
    %696 = vmatpush1.msra.mxu0 0.0
    %697 = vmatprep.subr.mxu0 0.0
    %698 = vmatpush1.msra.mxu0 0.0
    %699 = vmatprep.subr.mxu0 0.0
    %700 = vmatpush1.msra.mxu0 0.0
    %701 = vmatprep.subr.mxu0 0.0
    %702 = vmatpush1.msra.mxu0 0.0
    %703 = vmatprep.mubr.f32.mxu0 0.0
    %704 = vmatmul.mubr.f32.gmra.mrb[0].mxu0 %v637
    %v705 = vpop.f32.mrb[0].mxu0
    %v706 = vadd.f32 %v53, %v705
    %v707 = vpop.f32.mrb[0].mxu0
    %708 = vdwg.mxu0
    %v709 = vtanh.pop %v706
    %711 = vrot.lane.b32.xlu0 %v546, 32
    %v712 = vpop.permute.xlu0 %711
    %v714 = vsel %vm47, %v625, %v712
    %v716 = vsel %vm225, %v714, 0
    %718 = vmatprep.subr.mxu0 0.0
    %719 = vmatpush1.msra.mxu0 %v27
    %720 = vmatprep.subr.mxu0 0.0
    %721 = vmatpush1.msra.mxu0 %v28
    %722 = vmatprep.subr.mxu0 0.0
    %723 = vmatpush1.msra.mxu0 %v29
    %724 = vmatprep.subr.mxu0 0.0
    %725 = vmatpush1.msra.mxu0 %v30
    %726 = vmatprep.subr.mxu0 0.0
    %727 = vmatpush1.msra.mxu0 %v31
    %728 = vmatprep.subr.mxu0 0.0
    %729 = vmatpush1.msra.mxu0 %v32
    %730 = vmatprep.subr.mxu0 0.0
    %731 = vmatpush1.msra.mxu0 %v33
    %732 = vmatprep.subr.mxu0 0.0
    %733 = vmatpush1.msra.mxu0 %v34
    %734 = vmatprep.subr.mxu0 0.0
    %735 = vmatpush1.msra.mxu0 0.0
    %736 = vmatprep.subr.mxu0 0.0
    %737 = vmatpush1.msra.mxu0 0.0
    %738 = vmatprep.subr.mxu0 0.0
    %739 = vmatpush1.msra.mxu0 0.0
    %740 = vmatprep.subr.mxu0 0.0
    %741 = vmatpush1.msra.mxu0 0.0
    %742 = vmatprep.subr.mxu0 0.0
    %743 = vmatpush1.msra.mxu0 0.0
    %744 = vmatprep.subr.mxu0 0.0
    %745 = vmatpush1.msra.mxu0 0.0
    %746 = vmatprep.subr.mxu0 0.0
    %747 = vmatpush1.msra.mxu0 0.0
    %748 = vmatprep.subr.mxu0 0.0
    %749 = vmatpush1.msra.mxu0 0.0
    %750 = vmatprep.subr.mxu0 0.0
    %751 = vmatpush1.msra.mxu0 0.0
    %752 = vmatprep.subr.mxu0 0.0
    %753 = vmatpush1.msra.mxu0 0.0
    %754 = vmatprep.subr.mxu0 0.0
    %755 = vmatpush1.msra.mxu0 0.0
    %756 = vmatprep.subr.mxu0 0.0
    %757 = vmatpush1.msra.mxu0 0.0
    %758 = vmatprep.subr.mxu0 0.0
    %759 = vmatpush1.msra.mxu0 0.0
    %760 = vmatprep.subr.mxu0 0.0
    %761 = vmatpush1.msra.mxu0 0.0
    %762 = vmatprep.subr.mxu0 0.0
    %763 = vmatpush1.msra.mxu0 0.0
    %764 = vmatprep.subr.mxu0 0.0
    %765 = vmatpush1.msra.mxu0 0.0
    %766 = vmatprep.subr.mxu0 0.0
    %767 = vmatpush1.msra.mxu0 0.0
    %768 = vmatprep.subr.mxu0 0.0
    %769 = vmatpush1.msra.mxu0 0.0
    %770 = vmatprep.subr.mxu0 0.0
    %771 = vmatpush1.msra.mxu0 0.0
    %772 = vmatprep.subr.mxu0 0.0
    %773 = vmatpush1.msra.mxu0 0.0
    %774 = vmatprep.subr.mxu0 0.0
    %775 = vmatpush1.msra.mxu0 0.0
    %776 = vmatprep.subr.mxu0 0.0
    %777 = vmatpush1.msra.mxu0 0.0
    %778 = vmatprep.subr.mxu0 0.0
    %779 = vmatpush1.msra.mxu0 0.0
    %780 = vmatprep.subr.mxu0 0.0
    %781 = vmatpush1.msra.mxu0 0.0
    %782 = vmatprep.mubr.f32.mxu0 0.0
    %783 = vmatmul.mubr.f32.gmra.mrb[0].mxu0 %v716
    %v784 = vpop.f32.mrb[0].mxu0
    %v785 = vadd.f32 %v223, %v784
    %v786 = vpop.f32.mrb[0].mxu0
    %787 = vdwg.mxu0
    %v788 = vtanh.pop %v785
    %v789 = vld [vmem:[%s0 + $0x5] sm:$0x1]
    %v790 = vld [vmem:[%s0 + $0xd] sm:$0x1]
    %v793 = vrot.slane %v790, 7
    %v794 = vsel %vm42, %v793, %v789
    %795 = vrot.lane.b32.xlu0 %v794, 32
    %v796 = vpop.permute.xlu0 %795
    %v798 = vsel %vm47, %v709, %v796
    %v800 = vsel %vm55, %v798, 0
    %802 = vmatprep.subr.mxu0 0.0
    %803 = vmatpush1.msra.mxu0 %v21
    %804 = vmatprep.subr.mxu0 0.0
    %805 = vmatpush1.msra.mxu0 %v22
    %806 = vmatprep.subr.mxu0 0.0
    %807 = vmatpush1.msra.mxu0 %v23
    %808 = vmatprep.subr.mxu0 0.0
    %809 = vmatpush1.msra.mxu0 %v24
    %810 = vmatprep.subr.mxu0 0.0
    %811 = vmatpush1.msra.mxu0 %v25
    %812 = vmatprep.subr.mxu0 0.0
    %813 = vmatpush1.msra.mxu0 %v26
    %814 = vmatprep.subr.mxu0 0.0
    %815 = vmatpush1.msra.mxu0 0.0
    %816 = vmatprep.subr.mxu0 0.0
    %817 = vmatpush1.msra.mxu0 0.0
    %818 = vmatprep.subr.mxu0 0.0
    %819 = vmatpush1.msra.mxu0 0.0
    %820 = vmatprep.subr.mxu0 0.0
    %821 = vmatpush1.msra.mxu0 0.0
    %822 = vmatprep.subr.mxu0 0.0
    %823 = vmatpush1.msra.mxu0 0.0
    %824 = vmatprep.subr.mxu0 0.0
    %825 = vmatpush1.msra.mxu0 0.0
    %826 = vmatprep.subr.mxu0 0.0
    %827 = vmatpush1.msra.mxu0 0.0
    %828 = vmatprep.subr.mxu0 0.0
    %829 = vmatpush1.msra.mxu0 0.0
    %830 = vmatprep.subr.mxu0 0.0
    %831 = vmatpush1.msra.mxu0 0.0
    %832 = vmatprep.subr.mxu0 0.0
    %833 = vmatpush1.msra.mxu0 0.0
    %834 = vmatprep.subr.mxu0 0.0
    %835 = vmatpush1.msra.mxu0 0.0
    %836 = vmatprep.subr.mxu0 0.0
    %837 = vmatpush1.msra.mxu0 0.0
    %838 = vmatprep.subr.mxu0 0.0
    %839 = vmatpush1.msra.mxu0 0.0
    %840 = vmatprep.subr.mxu0 0.0
    %841 = vmatpush1.msra.mxu0 0.0
    %842 = vmatprep.subr.mxu0 0.0
    %843 = vmatpush1.msra.mxu0 0.0
    %844 = vmatprep.subr.mxu0 0.0
    %845 = vmatpush1.msra.mxu0 0.0
    %846 = vmatprep.subr.mxu0 0.0
    %847 = vmatpush1.msra.mxu0 0.0
    %848 = vmatprep.subr.mxu0 0.0
    %849 = vmatpush1.msra.mxu0 0.0
    %850 = vmatprep.subr.mxu0 0.0
    %851 = vmatpush1.msra.mxu0 0.0
    %852 = vmatprep.subr.mxu0 0.0
    %853 = vmatpush1.msra.mxu0 0.0
    %854 = vmatprep.subr.mxu0 0.0
    %855 = vmatpush1.msra.mxu0 0.0
    %856 = vmatprep.subr.mxu0 0.0
    %857 = vmatpush1.msra.mxu0 0.0
    %858 = vmatprep.subr.mxu0 0.0
    %859 = vmatpush1.msra.mxu0 0.0
    %860 = vmatprep.subr.mxu0 0.0
    %861 = vmatpush1.msra.mxu0 0.0
    %862 = vmatprep.subr.mxu0 0.0
    %863 = vmatpush1.msra.mxu0 0.0
    %864 = vmatprep.subr.mxu0 0.0
    %865 = vmatpush1.msra.mxu0 0.0
    %866 = vmatprep.mubr.f32.mxu0 0.0
    %867 = vmatmul.mubr.f32.gmra.mrb[0].mxu0 %v800
    %v868 = vpop.f32.mrb[0].mxu0
    %v869 = vadd.f32 %v53, %v868
    %v870 = vpop.f32.mrb[0].mxu0
    %871 = vdwg.mxu0
    %v872 = vtanh.pop %v869
    %874 = vrot.lane.b32.xlu0 %v709, 32
    %v875 = vpop.permute.xlu0 %874
    %v877 = vsel %vm47, %v788, %v875
    %v879 = vsel %vm225, %v877, 0
    %881 = vmatprep.subr.mxu0 0.0
    %882 = vmatpush1.msra.mxu0 %v27
    %883 = vmatprep.subr.mxu0 0.0
    %884 = vmatpush1.msra.mxu0 %v28
    %885 = vmatprep.subr.mxu0 0.0
    %886 = vmatpush1.msra.mxu0 %v29
    %887 = vmatprep.subr.mxu0 0.0
    %888 = vmatpush1.msra.mxu0 %v30
    %889 = vmatprep.subr.mxu0 0.0
    %890 = vmatpush1.msra.mxu0 %v31
    %891 = vmatprep.subr.mxu0 0.0
    %892 = vmatpush1.msra.mxu0 %v32
    %893 = vmatprep.subr.mxu0 0.0
    %894 = vmatpush1.msra.mxu0 %v33
    %895 = vmatprep.subr.mxu0 0.0
    %896 = vmatpush1.msra.mxu0 %v34
    %897 = vmatprep.subr.mxu0 0.0
    %898 = vmatpush1.msra.mxu0 0.0
    %899 = vmatprep.subr.mxu0 0.0
    %900 = vmatpush1.msra.mxu0 0.0
    %901 = vmatprep.subr.mxu0 0.0
    %902 = vmatpush1.msra.mxu0 0.0
    %903 = vmatprep.subr.mxu0 0.0
    %904 = vmatpush1.msra.mxu0 0.0
    %905 = vmatprep.subr.mxu0 0.0
    %906 = vmatpush1.msra.mxu0 0.0
    %907 = vmatprep.subr.mxu0 0.0
    %908 = vmatpush1.msra.mxu0 0.0
    %909 = vmatprep.subr.mxu0 0.0
    %910 = vmatpush1.msra.mxu0 0.0
    %911 = vmatprep.subr.mxu0 0.0
    %912 = vmatpush1.msra.mxu0 0.0
    %913 = vmatprep.subr.mxu0 0.0
    %914 = vmatpush1.msra.mxu0 0.0
    %915 = vmatprep.subr.mxu0 0.0
    %916 = vmatpush1.msra.mxu0 0.0
    %917 = vmatprep.subr.mxu0 0.0
    %918 = vmatpush1.msra.mxu0 0.0
    %919 = vmatprep.subr.mxu0 0.0
    %920 = vmatpush1.msra.mxu0 0.0
    %921 = vmatprep.subr.mxu0 0.0
    %922 = vmatpush1.msra.mxu0 0.0
    %923 = vmatprep.subr.mxu0 0.0
    %924 = vmatpush1.msra.mxu0 0.0
    %925 = vmatprep.subr.mxu0 0.0
    %926 = vmatpush1.msra.mxu0 0.0
    %927 = vmatprep.subr.mxu0 0.0
    %928 = vmatpush1.msra.mxu0 0.0
    %929 = vmatprep.subr.mxu0 0.0
    %930 = vmatpush1.msra.mxu0 0.0
    %931 = vmatprep.subr.mxu0 0.0
    %932 = vmatpush1.msra.mxu0 0.0
    %933 = vmatprep.subr.mxu0 0.0
    %934 = vmatpush1.msra.mxu0 0.0
    %935 = vmatprep.subr.mxu0 0.0
    %936 = vmatpush1.msra.mxu0 0.0
    %937 = vmatprep.subr.mxu0 0.0
    %938 = vmatpush1.msra.mxu0 0.0
    %939 = vmatprep.subr.mxu0 0.0
    %940 = vmatpush1.msra.mxu0 0.0
    %941 = vmatprep.subr.mxu0 0.0
    %942 = vmatpush1.msra.mxu0 0.0
    %943 = vmatprep.subr.mxu0 0.0
    %944 = vmatpush1.msra.mxu0 0.0
    %945 = vmatprep.mubr.f32.mxu0 0.0
    %946 = vmatmul.mubr.f32.gmra.mrb[0].mxu0 %v879
    %v947 = vpop.f32.mrb[0].mxu0
    %v948 = vadd.f32 %v223, %v947
    %v949 = vpop.f32.mrb[0].mxu0
    %950 = vdwg.mxu0
    %v951 = vtanh.pop %v948
    %v952 = vld [vmem:[%s0 + $0x6] sm:$0x1]
    %v953 = vld [vmem:[%s0 + $0xe] sm:$0x1]
    %v956 = vrot.slane %v953, 7
    %v957 = vsel %vm42, %v956, %v952
    %958 = vrot.lane.b32.xlu0 %v957, 32
    %v959 = vpop.permute.xlu0 %958
    %v961 = vsel %vm47, %v872, %v959
    %v963 = vsel %vm55, %v961, 0
    %965 = vmatprep.subr.mxu0 0.0
    %966 = vmatpush1.msra.mxu0 %v21
    %967 = vmatprep.subr.mxu0 0.0
    %968 = vmatpush1.msra.mxu0 %v22
    %969 = vmatprep.subr.mxu0 0.0
    %970 = vmatpush1.msra.mxu0 %v23
    %971 = vmatprep.subr.mxu0 0.0
    %972 = vmatpush1.msra.mxu0 %v24
    %973 = vmatprep.subr.mxu0 0.0
    %974 = vmatpush1.msra.mxu0 %v25
    %975 = vmatprep.subr.mxu0 0.0
    %976 = vmatpush1.msra.mxu0 %v26
    %977 = vmatprep.subr.mxu0 0.0
    %978 = vmatpush1.msra.mxu0 0.0
    %979 = vmatprep.subr.mxu0 0.0
    %980 = vmatpush1.msra.mxu0 0.0
    %981 = vmatprep.subr.mxu0 0.0
    %982 = vmatpush1.msra.mxu0 0.0
    %983 = vmatprep.subr.mxu0 0.0
    %984 = vmatpush1.msra.mxu0 0.0
    %985 = vmatprep.subr.mxu0 0.0
    %986 = vmatpush1.msra.mxu0 0.0
    %987 = vmatprep.subr.mxu0 0.0
    %988 = vmatpush1.msra.mxu0 0.0
    %989 = vmatprep.subr.mxu0 0.0
    %990 = vmatpush1.msra.mxu0 0.0
    %991 = vmatprep.subr.mxu0 0.0
    %992 = vmatpush1.msra.mxu0 0.0
    %993 = vmatprep.subr.mxu0 0.0
    %994 = vmatpush1.msra.mxu0 0.0
    %995 = vmatprep.subr.mxu0 0.0
    %996 = vmatpush1.msra.mxu0 0.0
    %997 = vmatprep.subr.mxu0 0.0
    %998 = vmatpush1.msra.mxu0 0.0
    %999 = vmatprep.subr.mxu0 0.0
    %1000 = vmatpush1.msra.mxu0 0.0
    %1001 = vmatprep.subr.mxu0 0.0
    %1002 = vmatpush1.msra.mxu0 0.0
    %1003 = vmatprep.subr.mxu0 0.0
    %1004 = vmatpush1.msra.mxu0 0.0
    %1005 = vmatprep.subr.mxu0 0.0
    %1006 = vmatpush1.msra.mxu0 0.0
    %1007 = vmatprep.subr.mxu0 0.0
    %1008 = vmatpush1.msra.mxu0 0.0
    %1009 = vmatprep.subr.mxu0 0.0
    %1010 = vmatpush1.msra.mxu0 0.0
    %1011 = vmatprep.subr.mxu0 0.0
    %1012 = vmatpush1.msra.mxu0 0.0
    %1013 = vmatprep.subr.mxu0 0.0
    %1014 = vmatpush1.msra.mxu0 0.0
    %1015 = vmatprep.subr.mxu0 0.0
    %1016 = vmatpush1.msra.mxu0 0.0
    %1017 = vmatprep.subr.mxu0 0.0
    %1018 = vmatpush1.msra.mxu0 0.0
    %1019 = vmatprep.subr.mxu0 0.0
    %1020 = vmatpush1.msra.mxu0 0.0
    %1021 = vmatprep.subr.mxu0 0.0
    %1022 = vmatpush1.msra.mxu0 0.0
    %1023 = vmatprep.subr.mxu0 0.0
    %1024 = vmatpush1.msra.mxu0 0.0
    %1025 = vmatprep.subr.mxu0 0.0
    %1026 = vmatpush1.msra.mxu0 0.0
    %1027 = vmatprep.subr.mxu0 0.0
    %1028 = vmatpush1.msra.mxu0 0.0
    %1029 = vmatprep.mubr.f32.mxu0 0.0
    %1030 = vmatmul.mubr.f32.gmra.mrb[0].mxu0 %v963
    %v1031 = vpop.f32.mrb[0].mxu0
    %v1032 = vadd.f32 %v53, %v1031
    %v1033 = vpop.f32.mrb[0].mxu0
    %1034 = vdwg.mxu0
    %v1035 = vtanh.pop %v1032
    %1037 = vrot.lane.b32.xlu0 %v872, 32
    %v1038 = vpop.permute.xlu0 %1037
    %v1040 = vsel %vm47, %v951, %v1038
    %v1042 = vsel %vm225, %v1040, 0
    %1044 = vmatprep.subr.mxu0 0.0
    %1045 = vmatpush1.msra.mxu0 %v27
    %1046 = vmatprep.subr.mxu0 0.0
    %1047 = vmatpush1.msra.mxu0 %v28
    %1048 = vmatprep.subr.mxu0 0.0
    %1049 = vmatpush1.msra.mxu0 %v29
    %1050 = vmatprep.subr.mxu0 0.0
    %1051 = vmatpush1.msra.mxu0 %v30
    %1052 = vmatprep.subr.mxu0 0.0
    %1053 = vmatpush1.msra.mxu0 %v31
    %1054 = vmatprep.subr.mxu0 0.0
    %1055 = vmatpush1.msra.mxu0 %v32
    %1056 = vmatprep.subr.mxu0 0.0
    %1057 = vmatpush1.msra.mxu0 %v33
    %1058 = vmatprep.subr.mxu0 0.0
    %1059 = vmatpush1.msra.mxu0 %v34
    %1060 = vmatprep.subr.mxu0 0.0
    %1061 = vmatpush1.msra.mxu0 0.0
    %1062 = vmatprep.subr.mxu0 0.0
    %1063 = vmatpush1.msra.mxu0 0.0
    %1064 = vmatprep.subr.mxu0 0.0
    %1065 = vmatpush1.msra.mxu0 0.0
    %1066 = vmatprep.subr.mxu0 0.0
    %1067 = vmatpush1.msra.mxu0 0.0
    %1068 = vmatprep.subr.mxu0 0.0
    %1069 = vmatpush1.msra.mxu0 0.0
    %1070 = vmatprep.subr.mxu0 0.0
    %1071 = vmatpush1.msra.mxu0 0.0
    %1072 = vmatprep.subr.mxu0 0.0
    %1073 = vmatpush1.msra.mxu0 0.0
    %1074 = vmatprep.subr.mxu0 0.0
    %1075 = vmatpush1.msra.mxu0 0.0
    %1076 = vmatprep.subr.mxu0 0.0
    %1077 = vmatpush1.msra.mxu0 0.0
    %1078 = vmatprep.subr.mxu0 0.0
    %1079 = vmatpush1.msra.mxu0 0.0
    %1080 = vmatprep.subr.mxu0 0.0
    %1081 = vmatpush1.msra.mxu0 0.0
    %1082 = vmatprep.subr.mxu0 0.0
    %1083 = vmatpush1.msra.mxu0 0.0
    %1084 = vmatprep.subr.mxu0 0.0
    %1085 = vmatpush1.msra.mxu0 0.0
    %1086 = vmatprep.subr.mxu0 0.0
    %1087 = vmatpush1.msra.mxu0 0.0
    %1088 = vmatprep.subr.mxu0 0.0
    %1089 = vmatpush1.msra.mxu0 0.0
    %1090 = vmatprep.subr.mxu0 0.0
    %1091 = vmatpush1.msra.mxu0 0.0
    %1092 = vmatprep.subr.mxu0 0.0
    %1093 = vmatpush1.msra.mxu0 0.0
    %1094 = vmatprep.subr.mxu0 0.0
    %1095 = vmatpush1.msra.mxu0 0.0
    %1096 = vmatprep.subr.mxu0 0.0
    %1097 = vmatpush1.msra.mxu0 0.0
    %1098 = vmatprep.subr.mxu0 0.0
    %1099 = vmatpush1.msra.mxu0 0.0
    %1100 = vmatprep.subr.mxu0 0.0
    %1101 = vmatpush1.msra.mxu0 0.0
    %1102 = vmatprep.subr.mxu0 0.0
    %1103 = vmatpush1.msra.mxu0 0.0
    %1104 = vmatprep.subr.mxu0 0.0
    %1105 = vmatpush1.msra.mxu0 0.0
    %1106 = vmatprep.subr.mxu0 0.0
    %1107 = vmatpush1.msra.mxu0 0.0
    %1108 = vmatprep.mubr.f32.mxu0 0.0
    %1109 = vmatmul.mubr.f32.gmra.mrb[0].mxu0 %v1042
    %v1110 = vpop.f32.mrb[0].mxu0
    %v1111 = vadd.f32 %v223, %v1110
    %v1112 = vpop.f32.mrb[0].mxu0
    %1113 = vdwg.mxu0
    %v1114 = vtanh.pop %v1111
    %v1115 = vld [vmem:[%s0 + $0x7] sm:$0x1]
    %v1116 = vld [vmem:[%s0 + $0xf] sm:$0x1]
    %v1119 = vrot.slane %v1116, 7
    %v1120 = vsel %vm42, %v1119, %v1115
    %1121 = vrot.lane.b32.xlu0 %v1120, 32
    %v1122 = vpop.permute.xlu0 %1121
    %v1124 = vsel %vm47, %v1035, %v1122
    %v1126 = vsel %vm55, %v1124, 0
    %1128 = vmatprep.subr.mxu0 0.0
    %1129 = vmatpush1.msra.mxu0 %v21
    %1130 = vmatprep.subr.mxu0 0.0
    %1131 = vmatpush1.msra.mxu0 %v22
    %1132 = vmatprep.subr.mxu0 0.0
    %1133 = vmatpush1.msra.mxu0 %v23
    %1134 = vmatprep.subr.mxu0 0.0
    %1135 = vmatpush1.msra.mxu0 %v24
    %1136 = vmatprep.subr.mxu0 0.0
    %1137 = vmatpush1.msra.mxu0 %v25
    %1138 = vmatprep.subr.mxu0 0.0
    %1139 = vmatpush1.msra.mxu0 %v26
    %1140 = vmatprep.subr.mxu0 0.0
    %1141 = vmatpush1.msra.mxu0 0.0
    %1142 = vmatprep.subr.mxu0 0.0
    %1143 = vmatpush1.msra.mxu0 0.0
    %1144 = vmatprep.subr.mxu0 0.0
    %1145 = vmatpush1.msra.mxu0 0.0
    %1146 = vmatprep.subr.mxu0 0.0
    %1147 = vmatpush1.msra.mxu0 0.0
    %1148 = vmatprep.subr.mxu0 0.0
    %1149 = vmatpush1.msra.mxu0 0.0
    %1150 = vmatprep.subr.mxu0 0.0
    %1151 = vmatpush1.msra.mxu0 0.0
    %1152 = vmatprep.subr.mxu0 0.0
    %1153 = vmatpush1.msra.mxu0 0.0
    %1154 = vmatprep.subr.mxu0 0.0
    %1155 = vmatpush1.msra.mxu0 0.0
    %1156 = vmatprep.subr.mxu0 0.0
    %1157 = vmatpush1.msra.mxu0 0.0
    %1158 = vmatprep.subr.mxu0 0.0
    %1159 = vmatpush1.msra.mxu0 0.0
    %1160 = vmatprep.subr.mxu0 0.0
    %1161 = vmatpush1.msra.mxu0 0.0
    %1162 = vmatprep.subr.mxu0 0.0
    %1163 = vmatpush1.msra.mxu0 0.0
    %1164 = vmatprep.subr.mxu0 0.0
    %1165 = vmatpush1.msra.mxu0 0.0
    %1166 = vmatprep.subr.mxu0 0.0
    %1167 = vmatpush1.msra.mxu0 0.0
    %1168 = vmatprep.subr.mxu0 0.0
    %1169 = vmatpush1.msra.mxu0 0.0
    %1170 = vmatprep.subr.mxu0 0.0
    %1171 = vmatpush1.msra.mxu0 0.0
    %1172 = vmatprep.subr.mxu0 0.0
    %1173 = vmatpush1.msra.mxu0 0.0
    %1174 = vmatprep.subr.mxu0 0.0
    %1175 = vmatpush1.msra.mxu0 0.0
    %1176 = vmatprep.subr.mxu0 0.0
    %1177 = vmatpush1.msra.mxu0 0.0
    %1178 = vmatprep.subr.mxu0 0.0
    %1179 = vmatpush1.msra.mxu0 0.0
    %1180 = vmatprep.subr.mxu0 0.0
    %1181 = vmatpush1.msra.mxu0 0.0
    %1182 = vmatprep.subr.mxu0 0.0
    %1183 = vmatpush1.msra.mxu0 0.0
    %1184 = vmatprep.subr.mxu0 0.0
    %1185 = vmatpush1.msra.mxu0 0.0
    %1186 = vmatprep.subr.mxu0 0.0
    %1187 = vmatpush1.msra.mxu0 0.0
    %1188 = vmatprep.subr.mxu0 0.0
    %1189 = vmatpush1.msra.mxu0 0.0
    %1190 = vmatprep.subr.mxu0 0.0
    %1191 = vmatpush1.msra.mxu0 0.0
    %1192 = vmatprep.mubr.f32.mxu0 0.0
    %1193 = vmatmul.mubr.f32.gmra.mrb[0].mxu0 %v1126
    %v1194 = vpop.f32.mrb[0].mxu0
    %v1195 = vadd.f32 %v53, %v1194
    %v1196 = vpop.f32.mrb[0].mxu0
    %1197 = vdwg.mxu0
    %v1198 = vtanh.pop %v1195
    %1200 = vrot.lane.b32.xlu0 %v1035, 32
    %v1201 = vpop.permute.xlu0 %1200
    %v1203 = vsel %vm47, %v1114, %v1201
    %v1205 = vsel %vm225, %v1203, 0
    %1207 = vmatprep.subr.mxu0 0.0
    %1208 = vmatpush1.msra.mxu0 %v27
    %1209 = vmatprep.subr.mxu0 0.0
    %1210 = vmatpush1.msra.mxu0 %v28
    %1211 = vmatprep.subr.mxu0 0.0
    %1212 = vmatpush1.msra.mxu0 %v29
    %1213 = vmatprep.subr.mxu0 0.0
    %1214 = vmatpush1.msra.mxu0 %v30
    %1215 = vmatprep.subr.mxu0 0.0
    %1216 = vmatpush1.msra.mxu0 %v31
    %1217 = vmatprep.subr.mxu0 0.0
    %1218 = vmatpush1.msra.mxu0 %v32
    %1219 = vmatprep.subr.mxu0 0.0
    %1220 = vmatpush1.msra.mxu0 %v33
    %1221 = vmatprep.subr.mxu0 0.0
    %1222 = vmatpush1.msra.mxu0 %v34
    %1223 = vmatprep.subr.mxu0 0.0
    %1224 = vmatpush1.msra.mxu0 0.0
    %1225 = vmatprep.subr.mxu0 0.0
    %1226 = vmatpush1.msra.mxu0 0.0
    %1227 = vmatprep.subr.mxu0 0.0
    %1228 = vmatpush1.msra.mxu0 0.0
    %1229 = vmatprep.subr.mxu0 0.0
    %1230 = vmatpush1.msra.mxu0 0.0
    %1231 = vmatprep.subr.mxu0 0.0
    %1232 = vmatpush1.msra.mxu0 0.0
    %1233 = vmatprep.subr.mxu0 0.0
    %1234 = vmatpush1.msra.mxu0 0.0
    %1235 = vmatprep.subr.mxu0 0.0
    %1236 = vmatpush1.msra.mxu0 0.0
    %1237 = vmatprep.subr.mxu0 0.0
    %1238 = vmatpush1.msra.mxu0 0.0
    %1239 = vmatprep.subr.mxu0 0.0
    %1240 = vmatpush1.msra.mxu0 0.0
    %1241 = vmatprep.subr.mxu0 0.0
    %1242 = vmatpush1.msra.mxu0 0.0
    %1243 = vmatprep.subr.mxu0 0.0
    %1244 = vmatpush1.msra.mxu0 0.0
    %1245 = vmatprep.subr.mxu0 0.0
    %1246 = vmatpush1.msra.mxu0 0.0
    %1247 = vmatprep.subr.mxu0 0.0
    %1248 = vmatpush1.msra.mxu0 0.0
    %1249 = vmatprep.subr.mxu0 0.0
    %1250 = vmatpush1.msra.mxu0 0.0
    %1251 = vmatprep.subr.mxu0 0.0
    %1252 = vmatpush1.msra.mxu0 0.0
    %1253 = vmatprep.subr.mxu0 0.0
    %1254 = vmatpush1.msra.mxu0 0.0
    %1255 = vmatprep.subr.mxu0 0.0
    %1256 = vmatpush1.msra.mxu0 0.0
    %1257 = vmatprep.subr.mxu0 0.0
    %1258 = vmatpush1.msra.mxu0 0.0
    %1259 = vmatprep.subr.mxu0 0.0
    %1260 = vmatpush1.msra.mxu0 0.0
    %1261 = vmatprep.subr.mxu0 0.0
    %1262 = vmatpush1.msra.mxu0 0.0
    %1263 = vmatprep.subr.mxu0 0.0
    %1264 = vmatpush1.msra.mxu0 0.0
    %1265 = vmatprep.subr.mxu0 0.0
    %1266 = vmatpush1.msra.mxu0 0.0
    %1267 = vmatprep.subr.mxu0 0.0
    %1268 = vmatpush1.msra.mxu0 0.0
    %1269 = vmatprep.subr.mxu0 0.0
    %1270 = vmatpush1.msra.mxu0 0.0
    %1271 = vmatprep.mubr.f32.mxu0 0.0
    %1272 = vmatmul.mubr.f32.gmra.mrb[0].mxu0 %v1205
    %v1273 = vpop.f32.mrb[0].mxu0
    %v1274 = vadd.f32 %v223, %v1273
    %v1275 = vpop.f32.mrb[0].mxu0
    %1276 = vdwg.mxu0
    %v1277 = vtanh.pop %v1274
    %1279 = vrot.lane.b32.xlu0 %v1198, 32
    %v1280 = vpop.permute.xlu0 %1279
    %v1282 = vsel %vm47, %v1277, %v1280
    %v1284 = vsel %vm225, %v1282, 0
    %1286 = vmatprep.subr.mxu0 0.0
    %1287 = vmatpush1.msra.mxu0 %v27
    %1288 = vmatprep.subr.mxu0 0.0
    %1289 = vmatpush1.msra.mxu0 %v28
    %1290 = vmatprep.subr.mxu0 0.0
    %1291 = vmatpush1.msra.mxu0 %v29
    %1292 = vmatprep.subr.mxu0 0.0
    %1293 = vmatpush1.msra.mxu0 %v30
    %1294 = vmatprep.subr.mxu0 0.0
    %1295 = vmatpush1.msra.mxu0 %v31
    %1296 = vmatprep.subr.mxu0 0.0
    %1297 = vmatpush1.msra.mxu0 %v32
    %1298 = vmatprep.subr.mxu0 0.0
    %1299 = vmatpush1.msra.mxu0 %v33
    %1300 = vmatprep.subr.mxu0 0.0
    %1301 = vmatpush1.msra.mxu0 %v34
    %1302 = vmatprep.subr.mxu0 0.0
    %1303 = vmatpush1.msra.mxu0 0.0
    %1304 = vmatprep.subr.mxu0 0.0
    %1305 = vmatpush1.msra.mxu0 0.0
    %1306 = vmatprep.subr.mxu0 0.0
    %1307 = vmatpush1.msra.mxu0 0.0
    %1308 = vmatprep.subr.mxu0 0.0
    %1309 = vmatpush1.msra.mxu0 0.0
    %1310 = vmatprep.subr.mxu0 0.0
    %1311 = vmatpush1.msra.mxu0 0.0
    %1312 = vmatprep.subr.mxu0 0.0
    %1313 = vmatpush1.msra.mxu0 0.0
    %1314 = vmatprep.subr.mxu0 0.0
    %1315 = vmatpush1.msra.mxu0 0.0
    %1316 = vmatprep.subr.mxu0 0.0
    %1317 = vmatpush1.msra.mxu0 0.0
    %1318 = vmatprep.subr.mxu0 0.0
    %1319 = vmatpush1.msra.mxu0 0.0
    %1320 = vmatprep.subr.mxu0 0.0
    %1321 = vmatpush1.msra.mxu0 0.0
    %1322 = vmatprep.subr.mxu0 0.0
    %1323 = vmatpush1.msra.mxu0 0.0
    %1324 = vmatprep.subr.mxu0 0.0
    %1325 = vmatpush1.msra.mxu0 0.0
    %1326 = vmatprep.subr.mxu0 0.0
    %1327 = vmatpush1.msra.mxu0 0.0
    %1328 = vmatprep.subr.mxu0 0.0
    %1329 = vmatpush1.msra.mxu0 0.0
    %1330 = vmatprep.subr.mxu0 0.0
    %1331 = vmatpush1.msra.mxu0 0.0
    %1332 = vmatprep.subr.mxu0 0.0
    %1333 = vmatpush1.msra.mxu0 0.0
    %1334 = vmatprep.subr.mxu0 0.0
    %1335 = vmatpush1.msra.mxu0 0.0
    %1336 = vmatprep.subr.mxu0 0.0
    %1337 = vmatpush1.msra.mxu0 0.0
    %1338 = vmatprep.subr.mxu0 0.0
    %1339 = vmatpush1.msra.mxu0 0.0
    %1340 = vmatprep.subr.mxu0 0.0
    %1341 = vmatpush1.msra.mxu0 0.0
    %1342 = vmatprep.subr.mxu0 0.0
    %1343 = vmatpush1.msra.mxu0 0.0
    %1344 = vmatprep.subr.mxu0 0.0
    %1345 = vmatpush1.msra.mxu0 0.0
    %1346 = vmatprep.subr.mxu0 0.0
    %1347 = vmatpush1.msra.mxu0 0.0
    %1348 = vmatprep.subr.mxu0 0.0
    %1349 = vmatpush1.msra.mxu0 0.0
    %1350 = vmatprep.mubr.f32.mxu0 0.0
    %1351 = vmatmul.mubr.f32.gmra.mrb[0].mxu0 %v1284
    %v1352 = vpop.f32.mrb[0].mxu0
    %v1353 = vadd.f32 %v223, %v1352
    %v1354 = vpop.f32.mrb[0].mxu0
    %1355 = vdwg.mxu0
    %v1356 = vtanh.pop %v1353
    %vm1357 = vcmask 254976
    %1358 = vst.msk [vmem:[#allocation2] sm:$0x3] %vm1357, %v1356
    // Predicated region
    $region22: #{many_to_one_forward.1} parent=1 // pred_check
      _
    $region23: #{many_to_one_forward.1} parent=1 // pred_check_branch
      %1360 = sbr.rel (0) target = $region25
    $region24: #{many_to_one_forward.1} parent=1 // pred_region
      %s1362 = ssub.s32 32, 32
      %1363 = vsyncadd [#allocation3], %s1362
      %s1365 = sshll.u32 [#allocation2], 4
      %s1366 = int_to_ptr.vmem [resolvable:$true] %s1365
      %1368 = dma.vmem_to_hbm [thread:$0]  %s1366, 32, %s5, [#allocation3]
    $region25: #{many_to_one_forward.1} parent=1 // pred_fallthru
      _
    // Predicated region
    $region26: #{many_to_one_forward.1} parent=1 // pred_check
      _
    $region27: #{many_to_one_forward.1} parent=1 // pred_check_branch
      %1370 = sbr.rel (0) target = $region29
    $region28: #{many_to_one_forward.1} parent=1 // pred_region
      %1371 = dma.done [#allocation3], 32
    $region29: #{many_to_one_forward.1} parent=1 // pred_fallthru
      _
    %1372 = vsyncpa [#allocation3], 1

</llo_original>
